<compile_context>
chip_gen: v7x
topology: tpu7x:2x2x1
jax: 0.10.0
libtpu: 0.0.40
codegen_flags: <defaults>
</compile_context>

<pallas_src>
import functools

import numpy as np
import jax
import jax.numpy as jnp
from jax import lax
from jax.experimental import pallas as pl
from jax.experimental.pallas import tpu as pltpu

LANE = 128


def _round_up(x, m):
    return (x + m - 1) // m * m


# ----------------------------------------------------------------------------
# Fused kernel: multi-hot gather (W1 pre-folded) + numq projection + ReLU +
# fused block-diagonal layer 2, one batch tile per grid step.
# ----------------------------------------------------------------------------
def _fused_kernel(idx_ref, numq_ref, tbl_ref, w1n_ref, b1_ref, w2_ref, b2_ref,
                  q_ref, a_ref):
    tb, n_idx = idx_ref.shape
    n_rows = tbl_ref.shape[0]
    dim_out = q_ref.shape[1]

    # Indices were pre-offset into disjoint row ranges of the packed table,
    # so a single OR-combined multi-hot mask selects all 7 rows at once.
    iota = lax.broadcasted_iota(jnp.int32, (tb, n_rows), 1)
    hit = idx_ref[:, 0:1] == iota
    for c in range(1, n_idx):
        hit = jnp.logical_or(hit, idx_ref[:, c:c + 1] == iota)
    mh = hit.astype(tbl_ref.dtype)                     # 0/1 exact in bf16

    # ONE gather matmul -> layer-1 partial sums already lane-placed (q | a).
    h = jnp.dot(mh, tbl_ref[...], preferred_element_type=jnp.float32)
    # Numeric-feature contribution (K = dim_num, tiny).
    h = h + jnp.dot(numq_ref[...].astype(w1n_ref.dtype), w1n_ref[...],
                    preferred_element_type=jnp.float32)
    h = jnp.maximum(h + b1_ref[...], 0.0)

    # Fused block-diagonal layer 2 -> [TB, 2*dim_out], split into two outputs.
    out = jnp.dot(h.astype(w2_ref.dtype), w2_ref[...],
                  preferred_element_type=jnp.float32) + b2_ref[...]
    q_ref[...] = out[:, :dim_out].astype(q_ref.dtype)
    a_ref[...] = out[:, dim_out:2 * dim_out].astype(a_ref.dtype)


# ----------------------------------------------------------------------------
# Parameter construction (PyTorch-equivalent layout; Linear stored [in, out])
# ----------------------------------------------------------------------------
def init_params(key, num_user, num_category, num_gen,
                dim_user, dim_category, dim_gen, dim_hour, dim_week,
                dim_num, dim_out):
    keys = jax.random.split(key, 13)
    dim_q_in = dim_user + dim_gen + dim_category + dim_hour + dim_week + dim_num
    dim_a_in = dim_user + dim_gen

    def nrm(k, shape, scale=0.02):
        return (scale * jax.random.normal(k, shape)).astype(jnp.float32)

    return {
        "emb_user": nrm(keys[0], (num_user, dim_user)),
        "emb_gen":  nrm(keys[1], (num_gen, dim_gen)),
        "emb_cat":  nrm(keys[2], (num_category, dim_category)),
        "emb_hour": nrm(keys[3], (24, dim_hour)),
        "emb_week": nrm(keys[4], (7, dim_week)),
        "q_w1": nrm(keys[5], (dim_q_in, dim_out)),
        "q_b1": nrm(keys[6], (1, dim_out)),
        "q_w2": nrm(keys[7], (dim_out, dim_out)),
        "q_b2": nrm(keys[8], (1, dim_out)),
        "a_w1": nrm(keys[9], (dim_a_in, dim_out)),
        "a_b1": nrm(keys[10], (1, dim_out)),
        "a_w2": nrm(keys[11], (dim_out, dim_out)),
        "a_b2": nrm(keys[12], (1, dim_out)),
    }


# ----------------------------------------------------------------------------
# Packing: fold W1 into per-table projections, place them at their destination
# columns of one stacked table; fused block-diagonal layer-2 weights.
# ----------------------------------------------------------------------------
def _pack_params(params, compute_dtype):
    du = params["emb_user"].shape[1]
    dg = params["emb_gen"].shape[1]
    dc = params["emb_cat"].shape[1]
    dh = params["emb_hour"].shape[1]
    dw = params["emb_week"].shape[1]
    dim_out = params["q_w1"].shape[1]
    dim_num = params["q_w1"].shape[0] - (du + dg + dc + dh + dw)
    h_pad = _round_up(2 * dim_out, LANE)
    out_cols = 2 * dim_out

    qw1, aw1 = params["q_w1"], params["a_w1"]
    qr = np.cumsum([0, du, dg, dc, dh, dw])  # row boundaries inside q_w1
    # (table, W1 row block, destination column offset) in idx-column order:
    # q_user, q_gen, category, hour, week, a_user, a_gen
    segs = [
        (params["emb_user"], qw1[qr[0]:qr[1]], 0),
        (params["emb_gen"],  qw1[qr[1]:qr[2]], 0),
        (params["emb_cat"],  qw1[qr[2]:qr[3]], 0),
        (params["emb_hour"], qw1[qr[3]:qr[4]], 0),
        (params["emb_week"], qw1[qr[4]:qr[5]], 0),
        (params["emb_user"], aw1[:du], dim_out),
        (params["emb_gen"],  aw1[du:du + dg], dim_out),
    ]
    sizes = [t.shape[0] for t, _, _ in segs]
    offsets = np.concatenate([[0], np.cumsum(sizes)[:-1]]).astype(np.int32)
    n_total = int(np.sum(sizes))
    n_pad = _round_up(n_total, LANE)

    tbl = jnp.zeros((n_pad, h_pad), jnp.float32)
    row = 0
    for t, w, col in segs:
        proj = jnp.dot(t, w)                     # fold W1 into the table (f32)
        tbl = tbl.at[row:row + t.shape[0], col:col + dim_out].set(proj)
        row += t.shape[0]

    w1n = jnp.zeros((dim_num, h_pad), jnp.float32)
    w1n = w1n.at[:, :dim_out].set(qw1[qr[5]:])

    b1 = jnp.zeros((1, h_pad), jnp.float32)
    b1 = b1.at[:, :dim_out].set(params["q_b1"])
    b1 = b1.at[:, dim_out:out_cols].set(params["a_b1"])

    w2 = jnp.zeros((h_pad, out_cols), jnp.float32)
    w2 = w2.at[:dim_out, :dim_out].set(params["q_w2"])
    w2 = w2.at[dim_out:out_cols, dim_out:].set(params["a_w2"])

    b2 = jnp.concatenate([params["q_b2"], params["a_b2"]], axis=1)

    return {
        "tbl": tbl.astype(compute_dtype),
        "w1n": w1n.astype(compute_dtype),
        "w2":  w2.astype(compute_dtype),
        "b1": b1, "b2": b2,
        "offsets": offsets, "dim_out": dim_out, "dim_num": dim_num,
        "n_pad": n_pad, "h_pad": h_pad, "out_cols": out_cols,
    }


# ----------------------------------------------------------------------------
# Forward pass
# ----------------------------------------------------------------------------
def user_category_forward(params, cat_q, num_q, question_user, num_qu,
                          answer_user, num_au, *,
                          compute_dtype=jnp.bfloat16, block_b=1024):
    packed = _pack_params(params, compute_dtype)
    dim_out, h_pad = packed["dim_out"], packed["h_pad"]
    n_pad, dim_num = packed["n_pad"], packed["dim_num"]

    B = cat_q.shape[0]
    off = jnp.asarray(packed["offsets"], jnp.int32)
    # Index columns: q_user, q_gen, category, hour, week, a_user, a_gen,
    # pre-offset into the packed table's disjoint row ranges.
    idx = jnp.stack([question_user[:, 0], question_user[:, 1],
                     cat_q[:, 0], cat_q[:, 1], cat_q[:, 2],
                     answer_user[:, 0], answer_user[:, 1]],
                    axis=1).astype(jnp.int32) + off[None, :]
    numq = num_q.astype(jnp.float32)

    # Balanced batch tiling: evenly-sized tiles (no ~2x padding), and >=2 grid
    # steps when the batch allows so "parallel" shards across both v7x TCs.
    n_tiles = pl.cdiv(B, block_b)
    if B >= 16:
        n_tiles = max(n_tiles, 2)
    tb = _round_up(pl.cdiv(B, n_tiles), 8)
    b_pad = _round_up(B, tb)
    if b_pad != B:
        idx = jnp.pad(idx, ((0, b_pad - B), (0, 0)))     # row 0 is in-range
        numq = jnp.pad(numq, ((0, b_pad - B), (0, 0)))
    grid = (b_pad // tb,)

    def nbytes(a):
        return a.size * a.dtype.itemsize

    cost = pl.CostEstimate(
        flops=2 * b_pad * (n_pad * h_pad + dim_num * h_pad
                           + h_pad * packed["out_cols"]),
        transcendentals=0,
        bytes_accessed=(nbytes(idx) + nbytes(numq)
                        + nbytes(packed["tbl"]) + nbytes(packed["w1n"])
                        + nbytes(packed["w2"]) + nbytes(packed["b1"])
                        + nbytes(packed["b2"])
                        + 2 * b_pad * dim_out * 4))

    def resident(arr):
        # Constant index_map -> stays VMEM-resident across the batch grid.
        # TODO(synk): add pipeline_mode=pl.Buffered(1) for production-scale
        # tables on v7x (64 MiB VMEM) to drop the default double buffer.
        return pl.BlockSpec(arr.shape, lambda i: (0, 0))

    q_out, a_out = pl.pallas_call(
        _fused_kernel,
        out_shape=(jax.ShapeDtypeStruct((b_pad, dim_out), jnp.float32),
                   jax.ShapeDtypeStruct((b_pad, dim_out), jnp.float32)),
        grid=grid,
        in_specs=[
            pl.BlockSpec((tb, idx.shape[1]), lambda i: (i, 0)),
            pl.BlockSpec((tb, dim_num), lambda i: (i, 0)),
            resident(packed["tbl"]),
            resident(packed["w1n"]),
            resident(packed["b1"]),
            resident(packed["w2"]),
            resident(packed["b2"]),
        ],
        out_specs=(pl.BlockSpec((tb, dim_out), lambda i: (i, 0)),
                   pl.BlockSpec((tb, dim_out), lambda i: (i, 0))),
        compiler_params=pltpu.CompilerParams(
            dimension_semantics=("parallel",)),
        cost_estimate=cost,
    )(idx, numq, packed["tbl"], packed["w1n"], packed["b1"],
      packed["w2"], packed["b2"])

    if b_pad != B:
        q_out, a_out = q_out[:B], a_out[:B]
    return q_out, a_out


# ----------------------------------------------------------------------------
# Reference (pure JAX, f32) for sanity check
# ----------------------------------------------------------------------------
def _ref_forward(params, cat_q, num_q, question_user, num_qu,
                 answer_user, num_au):
    quser_vec = params["emb_user"][question_user[:, 0]]
    qgen_vec = params["emb_gen"][question_user[:, 1]]
    c_vec = params["emb_cat"][cat_q[:, 0]]
    h_vec = params["emb_hour"][cat_q[:, 1]]
    w_vec = params["emb_week"][cat_q[:, 2]]
    auser_vec = params["emb_user"][answer_user[:, 0]]
    agen_vec = params["emb_gen"][answer_user[:, 1]]
    q_feat = jnp.concatenate(
        (quser_vec, qgen_vec, c_vec, h_vec, w_vec, num_q.astype(jnp.float32)),
        axis=1)
    a_feat = jnp.concatenate((auser_vec, agen_vec), axis=1)

    def mlp(x, w1, b1, w2, b2):
        return jnp.maximum(x @ w1 + b1, 0.0) @ w2 + b2

    return (mlp(q_feat, params["q_w1"], params["q_b1"],
                params["q_w2"], params["q_b2"]),
            mlp(a_feat, params["a_w1"], params["a_b1"],
                params["a_w2"], params["a_b2"]))


if __name__ == "__main__":
    num_user, num_category, num_gen = 50, 10, 5
    dim_user, dim_category, dim_gen = 16, 8, 8
    dim_hour, dim_week, dim_num, dim_out = 8, 8, 16, 32
    batch = 24   # exercises batch padding + a 2-step parallel grid

    key = jax.random.PRNGKey(0)
    kp, k1, k2, k3, k4, k5, k6, k7, k8 = jax.random.split(key, 9)

    params = init_params(kp, num_user, num_category, num_gen,
                         dim_user, dim_category, dim_gen, dim_hour, dim_week,
                         dim_num, dim_out)

    cat_q = jnp.stack([
        jax.random.randint(k1, (batch,), 0, num_category),
        jax.random.randint(k2, (batch,), 0, 24),
        jax.random.randint(k3, (batch,), 0, 7),
    ], axis=1)                                               # [B, 3] int32
    num_q = jax.random.normal(k4, (batch, dim_num), jnp.float32)
    question_user = jnp.stack([
        jax.random.randint(k5, (batch,), 0, num_user),
        jax.random.randint(k6, (batch,), 0, num_gen),
    ], axis=1)                                               # [B, 2] int32
    answer_user = jnp.stack([
        jax.random.randint(k7, (batch,), 0, num_user),
        jax.random.randint(k8, (batch,), 0, num_gen),
    ], axis=1)                                               # [B, 2] int32
    # num_qu / num_au are unused by the forward pass (signature parity only).
    num_qu = jnp.zeros((batch, 1), jnp.float32)
    num_au = jnp.zeros((batch, 1), jnp.float32)

    q_ref, a_ref = _ref_forward(params, cat_q, num_q, question_user,
                                num_qu, answer_user, num_au)

    fwd = jax.jit(user_category_forward,
                  static_argnames=("compute_dtype", "block_b"))

    # Exact-math (f32) path validates the W1-folded multi-hot packing algebra.
    q32, a32 = fwd(params, cat_q, num_q, question_user, num_qu,
                   answer_user, num_au, compute_dtype=jnp.float32)
    jax.block_until_ready((q32, a32))
    assert q32.shape == (batch, dim_out) and a32.shape == (batch, dim_out)
    assert jnp.allclose(q32, q_ref, atol=1e-5, rtol=1e-5)
    assert jnp.allclose(a32, a_ref, atol=1e-5, rtol=1e-5)

    # Default bf16-operand path (native MXU rate, half the weight/table bytes);
    # tolerance relaxed per bf16 rounding (outputs ~1e-2 scale, err ~1e-4).
    qbf, abf = fwd(params, cat_q, num_q, question_user, num_qu,
                   answer_user, num_au)
    jax.block_until_ready((qbf, abf))
    assert jnp.allclose(qbf, q_ref, atol=5e-3, rtol=5e-2)
    assert jnp.allclose(abf, a_ref, atol=5e-3, rtol=5e-2)

    print("KERNEL_OK")
</pallas_src>

<mosaic_0001>
module attributes {stable_mosaic.version = 11 : i64} {
  func.func @_fused_kernel(%arg0: i32, %arg1: memref<16x7xi32, #tpu.memory_space<vmem>>, %arg2: memref<16x16xf32, #tpu.memory_space<vmem>>, %arg3: memref<256x128xf32, #tpu.memory_space<vmem>>, %arg4: memref<16x128xf32, #tpu.memory_space<vmem>>, %arg5: memref<1x128xf32, #tpu.memory_space<vmem>>, %arg6: memref<128x64xf32, #tpu.memory_space<vmem>>, %arg7: memref<1x64xf32, #tpu.memory_space<vmem>>, %arg8: memref<16x32xf32, #tpu.memory_space<vmem>>, %arg9: memref<16x32xf32, #tpu.memory_space<vmem>>) attributes {dimension_semantics = [#tpu.dimension_semantics<parallel>], iteration_bounds = array<i64: 2>, scalar_prefetch = 0 : i64, scratch_operands = 0 : i64, tpu.core_type = #tpu.core_type<tc>, window_params = [{transform_indices = @transform_0, window_bounds = array<i64: 16, 7>}, {transform_indices = @transform_1, window_bounds = array<i64: 16, 16>}, {pipeline_mode = #tpu.pipeline_mode<synchronous>, transform_indices = @transform_2, window_bounds = array<i64: 256, 128>}, {pipeline_mode = #tpu.pipeline_mode<synchronous>, transform_indices = @transform_3, window_bounds = array<i64: 16, 128>}, {pipeline_mode = #tpu.pipeline_mode<synchronous>, transform_indices = @transform_4, window_bounds = array<i64: 1, 128>}, {pipeline_mode = #tpu.pipeline_mode<synchronous>, transform_indices = @transform_5, window_bounds = array<i64: 128, 64>}, {pipeline_mode = #tpu.pipeline_mode<synchronous>, transform_indices = @transform_6, window_bounds = array<i64: 1, 64>}, {transform_indices = @transform_7, window_bounds = array<i64: 16, 32>}, {transform_indices = @transform_8, window_bounds = array<i64: 16, 32>}]} {
    %0 = tpu.iota {dimensions = array<i32: 1>} : vector<16x256xi32>
    %c0 = arith.constant 0 : index
    %c0_0 = arith.constant 0 : index
    %1 = vector.load %arg1[%c0, %c0_0] : memref<16x7xi32, #tpu.memory_space<vmem>>, vector<16x1xi32>
    %2 = vector.broadcast %1 : vector<16x1xi32> to vector<16x256xi32>
    %3 = arith.cmpi eq, %2, %0 : vector<16x256xi32>
    %c0_1 = arith.constant 0 : index
    %c1 = arith.constant 1 : index
    %4 = vector.load %arg1[%c0_1, %c1] : memref<16x7xi32, #tpu.memory_space<vmem>>, vector<16x1xi32>
    %5 = vector.broadcast %4 : vector<16x1xi32> to vector<16x256xi32>
    %6 = arith.cmpi eq, %5, %0 : vector<16x256xi32>
    %7 = arith.ori %3, %6 : vector<16x256xi1>
    %c0_2 = arith.constant 0 : index
    %c2 = arith.constant 2 : index
    %8 = vector.load %arg1[%c0_2, %c2] : memref<16x7xi32, #tpu.memory_space<vmem>>, vector<16x1xi32>
    %9 = vector.broadcast %8 : vector<16x1xi32> to vector<16x256xi32>
    %10 = arith.cmpi eq, %9, %0 : vector<16x256xi32>
    %11 = arith.ori %7, %10 : vector<16x256xi1>
    %c0_3 = arith.constant 0 : index
    %c3 = arith.constant 3 : index
    %12 = vector.load %arg1[%c0_3, %c3] : memref<16x7xi32, #tpu.memory_space<vmem>>, vector<16x1xi32>
    %13 = vector.broadcast %12 : vector<16x1xi32> to vector<16x256xi32>
    %14 = arith.cmpi eq, %13, %0 : vector<16x256xi32>
    %15 = arith.ori %11, %14 : vector<16x256xi1>
    %c0_4 = arith.constant 0 : index
    %c4 = arith.constant 4 : index
    %16 = vector.load %arg1[%c0_4, %c4] : memref<16x7xi32, #tpu.memory_space<vmem>>, vector<16x1xi32>
    %17 = vector.broadcast %16 : vector<16x1xi32> to vector<16x256xi32>
    %18 = arith.cmpi eq, %17, %0 : vector<16x256xi32>
    %19 = arith.ori %15, %18 : vector<16x256xi1>
    %c0_5 = arith.constant 0 : index
    %c5 = arith.constant 5 : index
    %20 = vector.load %arg1[%c0_5, %c5] : memref<16x7xi32, #tpu.memory_space<vmem>>, vector<16x1xi32>
    %21 = vector.broadcast %20 : vector<16x1xi32> to vector<16x256xi32>
    %22 = arith.cmpi eq, %21, %0 : vector<16x256xi32>
    %23 = arith.ori %19, %22 : vector<16x256xi1>
    %c0_6 = arith.constant 0 : index
    %c6 = arith.constant 6 : index
    %24 = vector.load %arg1[%c0_6, %c6] : memref<16x7xi32, #tpu.memory_space<vmem>>, vector<16x1xi32>
    %25 = vector.broadcast %24 : vector<16x1xi32> to vector<16x256xi32>
    %26 = arith.cmpi eq, %25, %0 : vector<16x256xi32>
    %27 = arith.ori %23, %26 : vector<16x256xi1>
    %28 = arith.extui %27 : vector<16x256xi1> to vector<16x256xi32>
    %29 = arith.sitofp %28 : vector<16x256xi32> to vector<16x256xf32>
    %c0_7 = arith.constant 0 : index
    %c0_8 = arith.constant 0 : index
    %30 = vector.load %arg3[%c0_7, %c0_8] : memref<256x128xf32, #tpu.memory_space<vmem>>, vector<256x128xf32>
    %cst = arith.constant dense<0.000000e+00> : vector<16x128xf32>
    %31 = tpu.matmul %29, %30, %cst {dimension_numbers = #tpu.dot_dimension_numbers<[1], [0], [0], [1], [0, 0, 1, 1], [], []>} : vector<16x256xf32>, vector<256x128xf32>, vector<16x128xf32> -> vector<16x128xf32>
    %c0_9 = arith.constant 0 : index
    %c0_10 = arith.constant 0 : index
    %32 = vector.load %arg2[%c0_9, %c0_10] : memref<16x16xf32, #tpu.memory_space<vmem>>, vector<16x16xf32>
    %c0_11 = arith.constant 0 : index
    %c0_12 = arith.constant 0 : index
    %33 = vector.load %arg4[%c0_11, %c0_12] : memref<16x128xf32, #tpu.memory_space<vmem>>, vector<16x128xf32>
    %cst_13 = arith.constant dense<0.000000e+00> : vector<16x128xf32>
    %34 = tpu.matmul %32, %33, %cst_13 {dimension_numbers = #tpu.dot_dimension_numbers<[1], [0], [0], [1], [0, 0, 1, 1], [], []>} : vector<16x16xf32>, vector<16x128xf32>, vector<16x128xf32> -> vector<16x128xf32>
    %35 = arith.addf %31, %34 : vector<16x128xf32>
    %c0_14 = arith.constant 0 : index
    %c0_15 = arith.constant 0 : index
    %36 = vector.load %arg5[%c0_14, %c0_15] : memref<1x128xf32, #tpu.memory_space<vmem>>, vector<1x128xf32>
    %37 = vector.broadcast %36 : vector<1x128xf32> to vector<16x128xf32>
    %38 = arith.addf %35, %37 : vector<16x128xf32>
    %cst_16 = arith.constant 0.000000e+00 : f32
    %39 = vector.broadcast %cst_16 : f32 to vector<16x128xf32>
    %40 = arith.maximumf %38, %39 : vector<16x128xf32>
    %c0_17 = arith.constant 0 : index
    %c0_18 = arith.constant 0 : index
    %41 = vector.load %arg6[%c0_17, %c0_18] : memref<128x64xf32, #tpu.memory_space<vmem>>, vector<128x64xf32>
    %cst_19 = arith.constant dense<0.000000e+00> : vector<16x64xf32>
    %42 = tpu.matmul %40, %41, %cst_19 {dimension_numbers = #tpu.dot_dimension_numbers<[1], [0], [0], [1], [0, 0, 1, 1], [], []>} : vector<16x128xf32>, vector<128x64xf32>, vector<16x64xf32> -> vector<16x64xf32>
    %c0_20 = arith.constant 0 : index
    %c0_21 = arith.constant 0 : index
    %43 = vector.load %arg7[%c0_20, %c0_21] : memref<1x64xf32, #tpu.memory_space<vmem>>, vector<1x64xf32>
    %44 = vector.broadcast %43 : vector<1x64xf32> to vector<16x64xf32>
    %45 = arith.addf %42, %44 : vector<16x64xf32>
    %46 = vector.extract_strided_slice %45 {offsets = [0, 0], sizes = [16, 32], strides = [1, 1]} : vector<16x64xf32> to vector<16x32xf32>
    %c0_22 = arith.constant 0 : index
    %c0_23 = arith.constant 0 : index
    %47 = vector.load %arg8[%c0_22, %c0_23] : memref<16x32xf32, #tpu.memory_space<vmem>>, vector<16x32xf32>
    tpu.vector_store %arg8[%c0_22, %c0_23], %46 {strides = array<i32>} : memref<16x32xf32, #tpu.memory_space<vmem>>, vector<16x32xf32>,
    %48 = vector.extract_strided_slice %45 {offsets = [0, 32], sizes = [16, 32], strides = [1, 1]} : vector<16x64xf32> to vector<16x32xf32>
    %c0_24 = arith.constant 0 : index
    %c0_25 = arith.constant 0 : index
    %49 = vector.load %arg9[%c0_24, %c0_25] : memref<16x32xf32, #tpu.memory_space<vmem>>, vector<16x32xf32>
    tpu.vector_store %arg9[%c0_24, %c0_25], %48 {strides = array<i32>} : memref<16x32xf32, #tpu.memory_space<vmem>>, vector<16x32xf32>,
    return
  }
  func.func @transform_0(%arg0: i32) -> (i32, i32) {
    %c0_i32 = arith.constant 0 : i32
    %c0_i32_0 = arith.constant 0 : i32
    return %arg0, %c0_i32 : i32, i32
  }
  func.func @transform_1(%arg0: i32) -> (i32, i32) {
    %c0_i32 = arith.constant 0 : i32
    %c0_i32_0 = arith.constant 0 : i32
    return %arg0, %c0_i32 : i32, i32
  }
  func.func @transform_2(%arg0: i32) -> (i32, i32) {
    %c0_i32 = arith.constant 0 : i32
    %c0_i32_0 = arith.constant 0 : i32
    %c0_i32_1 = arith.constant 0 : i32
    return %c0_i32, %c0_i32_0 : i32, i32
  }
  func.func @transform_3(%arg0: i32) -> (i32, i32) {
    %c0_i32 = arith.constant 0 : i32
    %c0_i32_0 = arith.constant 0 : i32
    %c0_i32_1 = arith.constant 0 : i32
    return %c0_i32, %c0_i32_0 : i32, i32
  }
  func.func @transform_4(%arg0: i32) -> (i32, i32) {
    %c0_i32 = arith.constant 0 : i32
    %c0_i32_0 = arith.constant 0 : i32
    %c0_i32_1 = arith.constant 0 : i32
    return %c0_i32, %c0_i32_0 : i32, i32
  }
  func.func @transform_5(%arg0: i32) -> (i32, i32) {
    %c0_i32 = arith.constant 0 : i32
    %c0_i32_0 = arith.constant 0 : i32
    %c0_i32_1 = arith.constant 0 : i32
    return %c0_i32, %c0_i32_0 : i32, i32
  }
  func.func @transform_6(%arg0: i32) -> (i32, i32) {
    %c0_i32 = arith.constant 0 : i32
    %c0_i32_0 = arith.constant 0 : i32
    %c0_i32_1 = arith.constant 0 : i32
    return %c0_i32, %c0_i32_0 : i32, i32
  }
  func.func @transform_7(%arg0: i32) -> (i32, i32) {
    %c0_i32 = arith.constant 0 : i32
    %c0_i32_0 = arith.constant 0 : i32
    return %arg0, %c0_i32 : i32, i32
  }
  func.func @transform_8(%arg0: i32) -> (i32, i32) {
    %c0_i32 = arith.constant 0 : i32
    %c0_i32_0 = arith.constant 0 : i32
    return %arg0, %c0_i32 : i32, i32
  }
}

</mosaic_0001>

<llo_original>
// kernel: user_category_forward.1
$region0: #{user_category_forward.1}
  #allocation0 [shape = 'u32[]', space=smem, size = 0x4, offset = 0x4, fixed_abs, tag = 'smem constant byte address 0x4 - core index']
  #allocation1 [shape = 'u32[144,128]{1,0:T(1,128)}', space=vmem, size = 0x12000, scoped, tag = 'internal scratch']
  %s0 = inlined_call_operand.vmem [shape: s32[32,7], index: 0, kind: input, shape index: {}]
  %s1 = inlined_call_operand.vmem [shape: f32[32,16], index: 1, kind: input, shape index: {}]
  %s2 = inlined_call_operand.vmem [shape: f32[256,128], index: 2, kind: input, shape index: {}]
  %s3 = inlined_call_operand.vmem [shape: f32[16,128], index: 3, kind: input, shape index: {}]
  %s4 = inlined_call_operand.vmem [shape: f32[1,128], index: 4, kind: input, shape index: {}]
  %s5 = inlined_call_operand.vmem [shape: f32[128,64], index: 5, kind: input, shape index: {}]
  %s6 = inlined_call_operand.vmem [shape: f32[1,64], index: 6, kind: input, shape index: {}]
  %s7 = inlined_call_operand.vmem [shape: f32[32,32], index: 7, kind: output, shape index: {0}]
  %s8 = inlined_call_operand.vmem [shape: f32[32,32], index: 8, kind: output, shape index: {1}]
  %9 = xla_tuple %s7, %s8
  %s10 = sld [smem:[#allocation0]]
  $region69: #{user_category_forward.1} parent=0
    _
  %s12 = ssub.s32 1, %s10
  %s13 = scalar_select 0, %s12, %s10
  loop: start=0, step=1, limit=4
  $region2: #{user_category_forward.1} parent=0 // loop_pre_header
    _
  $region3: #{user_category_forward.1} parent=0 // loop_header
    %s15 = sphi 0, %s19
    %p16 = scmp.ge.s32.totalorder %s15, 4
    %s25 = sphi 0, %s27
    %s28 = sphi 0, %s25
    %s29 = sphi 0, %s28
    %s45 = sphi 0, %s29
    %s51 = sphi 0, %s53
    %s54 = sphi 0, %s51
    %s55 = sphi 0, %s54
    %s71 = sphi 0, %s55
    %s75 = sphi 0, %s75
    %s77 = sphi 0, %s75
    %s78 = sphi 0, %s77
    %s92 = sphi 0, %s78
    %s96 = sphi 0, %s96
    %s98 = sphi 0, %s96
    %s99 = sphi 0, %s98
    %s113 = sphi 0, %s99
    %s117 = sphi 0, %s117
    %s119 = sphi 0, %s117
    %s120 = sphi 0, %s119
    %s134 = sphi 0, %s120
    %s138 = sphi 0, %s138
    %s140 = sphi 0, %s138
    %s141 = sphi 0, %s140
    %s155 = sphi 0, %s141
    %s159 = sphi 0, %s159
    %s161 = sphi 0, %s159
    %s162 = sphi 0, %s161
    %s176 = sphi 0, %s162
    %s182 = sphi 0, %s184
    %s185 = sphi 0, %s182
    %s186 = sphi 0, %s185
    %s202 = sphi 0, %s186
    %s208 = sphi 0, %s210
    %s211 = sphi 0, %s208
    %s212 = sphi 0, %s211
    %s228 = sphi 0, %s212
  $region4: #{user_category_forward.1} parent=0 // loop_header_branch
    %18 = sbr.rel (%p16) target = $region8
  $region5: #{user_category_forward.1} parent=0 // loop_body
    %s20 = ssub.s32 %s15, 1
    %s21 = ssub.s32 %s15, 2
    %s22 = sadd.s32 %s15, 1
    %s23 = ssub.s32 %s15, %s22
    %p24 = scmp.eq.s32.totalorder %s23, 0
    %s26 = sadd.s32 %s25, 1
    %s27 = scalar_select %p24, %s25, %s26
    %p30 = pneg %p24
    %p31 = scmp.eq.s32.totalorder %s15, 1
    %p32 = por %p30, %p31
    %p33 = scmp.ne.s32.totalorder %s25, %s28
    %p34 = scmp.eq.s32.totalorder %s15, 0
    %p35 = por %p33, %p34
    %p36 = scmp.ne.s32.totalorder %s25, %s28
    %p37 = scmp.eq.s32.totalorder %s20, 1
    %p38 = por %p36, %p37
    %p39 = scmp.ne.s32.totalorder %s28, %s29
    %p40 = scmp.eq.s32.totalorder %s20, 0
    %p41 = por %p39, %p40
    %p42 = scmp.ne.s32.totalorder %s28, %s29
    %p43 = scmp.eq.s32.totalorder %s21, 1
    %p44 = por %p42, %p43
    %p46 = scmp.ne.s32.totalorder %s29, %s45
    %p47 = scmp.eq.s32.totalorder %s21, 0
    %p48 = por %p46, %p47
    %s49 = ssub.s32 %s15, %s22
    %p50 = scmp.eq.s32.totalorder %s49, 0
    %s52 = sadd.s32 %s51, 1
    %s53 = scalar_select %p50, %s51, %s52
    %p56 = pneg %p50
    %p57 = scmp.eq.s32.totalorder %s15, 1
    %p58 = por %p56, %p57
    %p59 = scmp.ne.s32.totalorder %s51, %s54
    %p60 = scmp.eq.s32.totalorder %s15, 0
    %p61 = por %p59, %p60
    %p62 = scmp.ne.s32.totalorder %s51, %s54
    %p63 = scmp.eq.s32.totalorder %s20, 1
    %p64 = por %p62, %p63
    %p65 = scmp.ne.s32.totalorder %s54, %s55
    %p66 = scmp.eq.s32.totalorder %s20, 0
    %p67 = por %p65, %p66
    %p68 = scmp.ne.s32.totalorder %s54, %s55
    %p69 = scmp.eq.s32.totalorder %s21, 1
    %p70 = por %p68, %p69
    %p72 = scmp.ne.s32.totalorder %s55, %s71
    %p73 = scmp.eq.s32.totalorder %s21, 0
    %p74 = por %p72, %p73
    %s76 = sadd.s32 %s75, 1
    %p79 = scmp.eq.s32.totalorder %s15, 1
    %p80 = scmp.ne.s32.totalorder %s75, %s77
    %p81 = scmp.eq.s32.totalorder %s15, 0
    %p82 = por %p80, %p81
    %p83 = scmp.ne.s32.totalorder %s75, %s77
    %p84 = scmp.eq.s32.totalorder %s20, 1
    %p85 = por %p83, %p84
    %p86 = scmp.ne.s32.totalorder %s77, %s78
    %p87 = scmp.eq.s32.totalorder %s20, 0
    %p88 = por %p86, %p87
    %p89 = scmp.ne.s32.totalorder %s77, %s78
    %p90 = scmp.eq.s32.totalorder %s21, 1
    %p91 = por %p89, %p90
    %p93 = scmp.ne.s32.totalorder %s78, %s92
    %p94 = scmp.eq.s32.totalorder %s21, 0
    %p95 = por %p93, %p94
    %s97 = sadd.s32 %s96, 1
    %p100 = scmp.eq.s32.totalorder %s15, 1
    %p101 = scmp.ne.s32.totalorder %s96, %s98
    %p102 = scmp.eq.s32.totalorder %s15, 0
    %p103 = por %p101, %p102
    %p104 = scmp.ne.s32.totalorder %s96, %s98
    %p105 = scmp.eq.s32.totalorder %s20, 1
    %p106 = por %p104, %p105
    %p107 = scmp.ne.s32.totalorder %s98, %s99
    %p108 = scmp.eq.s32.totalorder %s20, 0
    %p109 = por %p107, %p108
    %p110 = scmp.ne.s32.totalorder %s98, %s99
    %p111 = scmp.eq.s32.totalorder %s21, 1
    %p112 = por %p110, %p111
    %p114 = scmp.ne.s32.totalorder %s99, %s113
    %p115 = scmp.eq.s32.totalorder %s21, 0
    %p116 = por %p114, %p115
    %s118 = sadd.s32 %s117, 1
    %p121 = scmp.eq.s32.totalorder %s15, 1
    %p122 = scmp.ne.s32.totalorder %s117, %s119
    %p123 = scmp.eq.s32.totalorder %s15, 0
    %p124 = por %p122, %p123
    %p125 = scmp.ne.s32.totalorder %s117, %s119
    %p126 = scmp.eq.s32.totalorder %s20, 1
    %p127 = por %p125, %p126
    %p128 = scmp.ne.s32.totalorder %s119, %s120
    %p129 = scmp.eq.s32.totalorder %s20, 0
    %p130 = por %p128, %p129
    %p131 = scmp.ne.s32.totalorder %s119, %s120
    %p132 = scmp.eq.s32.totalorder %s21, 1
    %p133 = por %p131, %p132
    %p135 = scmp.ne.s32.totalorder %s120, %s134
    %p136 = scmp.eq.s32.totalorder %s21, 0
    %p137 = por %p135, %p136
    %s139 = sadd.s32 %s138, 1
    %p142 = scmp.eq.s32.totalorder %s15, 1
    %p143 = scmp.ne.s32.totalorder %s138, %s140
    %p144 = scmp.eq.s32.totalorder %s15, 0
    %p145 = por %p143, %p144
    %p146 = scmp.ne.s32.totalorder %s138, %s140
    %p147 = scmp.eq.s32.totalorder %s20, 1
    %p148 = por %p146, %p147
    %p149 = scmp.ne.s32.totalorder %s140, %s141
    %p150 = scmp.eq.s32.totalorder %s20, 0
    %p151 = por %p149, %p150
    %p152 = scmp.ne.s32.totalorder %s140, %s141
    %p153 = scmp.eq.s32.totalorder %s21, 1
    %p154 = por %p152, %p153
    %p156 = scmp.ne.s32.totalorder %s141, %s155
    %p157 = scmp.eq.s32.totalorder %s21, 0
    %p158 = por %p156, %p157
    %s160 = sadd.s32 %s159, 1
    %p163 = scmp.eq.s32.totalorder %s15, 1
    %p164 = scmp.ne.s32.totalorder %s159, %s161
    %p165 = scmp.eq.s32.totalorder %s15, 0
    %p166 = por %p164, %p165
    %p167 = scmp.ne.s32.totalorder %s159, %s161
    %p168 = scmp.eq.s32.totalorder %s20, 1
    %p169 = por %p167, %p168
    %p170 = scmp.ne.s32.totalorder %s161, %s162
    %p171 = scmp.eq.s32.totalorder %s20, 0
    %p172 = por %p170, %p171
    %p173 = scmp.ne.s32.totalorder %s161, %s162
    %p174 = scmp.eq.s32.totalorder %s21, 1
    %p175 = por %p173, %p174
    %p177 = scmp.ne.s32.totalorder %s162, %s176
    %p178 = scmp.eq.s32.totalorder %s21, 0
    %p179 = por %p177, %p178
    %s180 = ssub.s32 %s15, %s22
    %p181 = scmp.eq.s32.totalorder %s180, 0
    %s183 = sadd.s32 %s182, 1
    %s184 = scalar_select %p181, %s182, %s183
    %p187 = pneg %p181
    %p188 = scmp.eq.s32.totalorder %s15, 1
    %p189 = por %p187, %p188
    %p190 = scmp.ne.s32.totalorder %s182, %s185
    %p191 = scmp.eq.s32.totalorder %s15, 0
    %p192 = por %p190, %p191
    %p193 = scmp.ne.s32.totalorder %s182, %s185
    %p194 = scmp.eq.s32.totalorder %s20, 1
    %p195 = por %p193, %p194
    %p196 = scmp.ne.s32.totalorder %s185, %s186
    %p197 = scmp.eq.s32.totalorder %s20, 0
    %p198 = por %p196, %p197
    %p199 = scmp.ne.s32.totalorder %s185, %s186
    %p200 = scmp.eq.s32.totalorder %s21, 1
    %p201 = por %p199, %p200
    %p203 = scmp.ne.s32.totalorder %s186, %s202
    %p204 = scmp.eq.s32.totalorder %s21, 0
    %p205 = por %p203, %p204
    %s206 = ssub.s32 %s15, %s22
    %p207 = scmp.eq.s32.totalorder %s206, 0
    %s209 = sadd.s32 %s208, 1
    %s210 = scalar_select %p207, %s208, %s209
    %p213 = pneg %p207
    %p214 = scmp.eq.s32.totalorder %s15, 1
    %p215 = por %p213, %p214
    %p216 = scmp.ne.s32.totalorder %s208, %s211
    %p217 = scmp.eq.s32.totalorder %s15, 0
    %p218 = por %p216, %p217
    %p219 = scmp.ne.s32.totalorder %s208, %s211
    %p220 = scmp.eq.s32.totalorder %s20, 1
    %p221 = por %p219, %p220
    %p222 = scmp.ne.s32.totalorder %s211, %s212
    %p223 = scmp.eq.s32.totalorder %s20, 0
    %p224 = por %p222, %p223
    %p225 = scmp.ne.s32.totalorder %s211, %s212
    %p226 = scmp.eq.s32.totalorder %s21, 1
    %p227 = por %p225, %p226
    %p229 = scmp.ne.s32.totalorder %s212, %s228
    %p230 = scmp.eq.s32.totalorder %s21, 0
    %p231 = por %p229, %p230
    %p232 = scmp.le.s32.totalorder 1, %s15
    %p233 = scmp.lt.s32.totalorder %s15, 3
    %p234 = pnand %p232, %p233
    %p235 = pneg %p234
    // Predicated region
    $region9: #{user_category_forward.1} parent=5 // pred_check
      _
    $region10: #{user_category_forward.1} parent=5 // pred_check_branch
      %237 = sbr.rel (%p234) target = $region12
    $region11: #{user_category_forward.1} parent=5 // pred_region
      %s238 = ssub.s32 %s15, 1
      // Predicated region
      $region13: #{user_category_forward.1} parent=11 // pred_check
        %p239 = pneg %p88
      $region14: #{user_category_forward.1} parent=11 // pred_check_branch
        %241 = sbr.rel (%p239) target = $region16
      $region15: #{user_category_forward.1} parent=11 // pred_region
        _
      $region16: #{user_category_forward.1} parent=11 // pred_fallthru
        _
      // Predicated region
      $region17: #{user_category_forward.1} parent=11 // pred_check
        %p242 = pneg %p109
      $region18: #{user_category_forward.1} parent=11 // pred_check_branch
        %244 = sbr.rel (%p242) target = $region20
      $region19: #{user_category_forward.1} parent=11 // pred_region
        _
      $region20: #{user_category_forward.1} parent=11 // pred_fallthru
        _
      // Predicated region
      $region21: #{user_category_forward.1} parent=11 // pred_check
        %p245 = pneg %p130
      $region22: #{user_category_forward.1} parent=11 // pred_check_branch
        %247 = sbr.rel (%p245) target = $region24
      $region23: #{user_category_forward.1} parent=11 // pred_region
        _
      $region24: #{user_category_forward.1} parent=11 // pred_fallthru
        _
      // Predicated region
      $region25: #{user_category_forward.1} parent=11 // pred_check
        %p248 = pneg %p151
      $region26: #{user_category_forward.1} parent=11 // pred_check_branch
        %250 = sbr.rel (%p248) target = $region28
      $region27: #{user_category_forward.1} parent=11 // pred_region
        _
      $region28: #{user_category_forward.1} parent=11 // pred_fallthru
        _
      // Predicated region
      $region29: #{user_category_forward.1} parent=11 // pred_check
        %p251 = pneg %p172
      $region30: #{user_category_forward.1} parent=11 // pred_check_branch
        %253 = sbr.rel (%p251) target = $region32
      $region31: #{user_category_forward.1} parent=11 // pred_region
        _
      $region32: #{user_category_forward.1} parent=11 // pred_fallthru
        _
    $region12: #{user_category_forward.1} parent=5 // pred_fallthru
      _
    %p254 = scmp.lt.s32.totalorder %s15, 2
    // Predicated region
    $region33: #{user_category_forward.1} parent=5 // pred_check
      %p255 = pneg %p254
    $region34: #{user_category_forward.1} parent=5 // pred_check_branch
      %257 = sbr.rel (%p255) target = $region36
    $region35: #{user_category_forward.1} parent=5 // pred_region
      // Predicated region
      $region37: #{user_category_forward.1} parent=35 // pred_check
        %p258 = pneg %p35
      $region38: #{user_category_forward.1} parent=35 // pred_check_branch
        %260 = sbr.rel (%p258) target = $region40
      $region39: #{user_category_forward.1} parent=35 // pred_region
        %s261 = smul.u32 2, %s15
        %p262 = scmp.lt.s32.totalorder %s261, 3
        %s263 = scalar_select %p262, %s261, 3
        %s264 = smul.addr %s263, 8
        %s265 = scalar_lea.vmem %s0, %s264
        %s266 = smul.u32 2, %s15
      $region40: #{user_category_forward.1} parent=35 // pred_fallthru
        _
      // Predicated region
      $region41: #{user_category_forward.1} parent=35 // pred_check
        %p267 = pneg %p61
      $region42: #{user_category_forward.1} parent=35 // pred_check_branch
        %269 = sbr.rel (%p267) target = $region44
      $region43: #{user_category_forward.1} parent=35 // pred_region
        %s270 = smul.u32 2, %s15
        %p271 = scmp.lt.s32.totalorder %s270, 3
        %s272 = scalar_select %p271, %s270, 3
        %s273 = smul.addr %s272, 8
        %s274 = scalar_lea.vmem %s1, %s273
        %s275 = smul.u32 2, %s15
      $region44: #{user_category_forward.1} parent=35 // pred_fallthru
        _
    $region36: #{user_category_forward.1} parent=5 // pred_fallthru
      _
    %p276 = scmp.le.s32.totalorder 1, %s15
    %p277 = scmp.lt.s32.totalorder %s15, 3
    %p278 = pnand %p276, %p277
    %p279 = pneg %p278
    // Predicated region
    $region45: #{user_category_forward.1} parent=5 // pred_check
      _
    $region46: #{user_category_forward.1} parent=5 // pred_check_branch
      %281 = sbr.rel (%p278) target = $region48
    $region47: #{user_category_forward.1} parent=5 // pred_region
      %s282 = ssub.s32 %s15, 1
      %s283 = smul.u32 2, %s20
      %p284 = scmp.lt.s32.totalorder %s283, 3
      %s285 = scalar_select %p284, %s283, 3
      %s286 = smul.addr %s285, 8
      %s287 = scalar_lea.vmem %s0, %s286
      %p288 = pneg %p41
      %p289 = pneg %p38
      %s290 = smul.u32 2, %s20
      %p291 = scmp.lt.s32.totalorder %s290, 3
      %s292 = scalar_select %p291, %s290, 3
      %s293 = smul.addr %s292, 8
      %s294 = scalar_lea.vmem %s1, %s293
      %p295 = pneg %p67
      %p296 = pneg %p64
      %p297 = pneg %p88
      %p298 = pneg %p85
      %p299 = pneg %p109
      %p300 = pneg %p106
      %p301 = pneg %p130
      %p302 = pneg %p127
      %p303 = pneg %p151
      %p304 = pneg %p148
      %p305 = pneg %p172
      %p306 = pneg %p169
      %p307 = pneg %p198
      %p308 = pneg %p195
      %s309 = smul.u32 2, %s20
      %p310 = scmp.lt.s32.totalorder %s309, 3
      %s311 = scalar_select %p310, %s309, 3
      %s312 = smul.addr %s311, 8
      %s313 = scalar_lea.vmem %s7, %s312
      %p314 = pneg %p224
      %p315 = pneg %p221
      %s316 = smul.u32 2, %s20
      %p317 = scmp.lt.s32.totalorder %s316, 3
      %s318 = scalar_select %p317, %s316, 3
      %s319 = smul.addr %s318, 8
      %s320 = scalar_lea.vmem %s8, %s319
      %s321 = smul.u32 2, %s20
      %p322 = scmp.lt.s32.totalorder %s321, 3
      %s323 = scalar_select %p322, %s321, 3
      %s324 = smul.addr %s323, 8
      %s325 = scalar_lea.vmem %s0, %s324
      %s326 = smul.u32 2, %s20
      %s327 = smul.u32 2, %s20
      %p328 = scmp.lt.s32.totalorder %s327, 3
      %s329 = scalar_select %p328, %s327, 3
      %s330 = smul.addr %s329, 8
      %s331 = scalar_lea.vmem %s1, %s330
      %s332 = smul.u32 2, %s20
      %s333 = smul.u32 2, %s20
      %p334 = scmp.lt.s32.totalorder %s333, 3
      %s335 = scalar_select %p334, %s333, 3
      %s336 = smul.addr %s335, 8
      %s337 = scalar_lea.vmem %s7, %s336
      %s338 = smul.u32 2, %s20
      %s339 = smul.u32 2, %s20
      %p340 = scmp.lt.s32.totalorder %s339, 3
      %s341 = scalar_select %p340, %s339, 3
      %s342 = smul.addr %s341, 8
      %s343 = scalar_lea.vmem %s8, %s342
      %s344 = smul.u32 2, %s20
      %v345 = vlaneseq
      %v346 = vand.u32 %v345, 127
      %v347 = vadd.s32 %v346, 128
      %v348 = vld [vmem:[%s325] sm:$0xff]
      %v349 = vld [vmem:[%s325 + $0x8] sm:$0xff]
      %350 = vset.pattern.permute.xlu0 0
      %351 = vperm.xlu0 %350, %v348
      %v352 = vpop.permute.xlu0 %351
      %353 = vset.pattern.permute.xlu0 0
      %354 = vperm.xlu0 %353, %v349
      %v355 = vpop.permute.xlu0 %354
      %vm356 = vcmp.eq.s32.totalorder %v352, %v346
      %vm357 = vcmp.eq.s32.totalorder %v352, %v347
      %vm358 = vcmp.eq.s32.totalorder %v355, %v346
      %vm359 = vcmp.eq.s32.totalorder %v355, %v347
      %360 = vset.pattern.permute.xlu0 1
      %361 = vperm.xlu0 %360, %v348
      %v362 = vpop.permute.xlu0 %361
      %363 = vset.pattern.permute.xlu0 1
      %364 = vperm.xlu0 %363, %v349
      %v365 = vpop.permute.xlu0 %364
      %vm366 = vcmp.eq.s32.totalorder %v362, %v346
      %vm367 = vcmp.eq.s32.totalorder %v362, %v347
      %vm368 = vcmp.eq.s32.totalorder %v365, %v346
      %vm369 = vcmp.eq.s32.totalorder %v365, %v347
      %vm370 = vmor %vm356, %vm366
      %vm371 = vmor %vm357, %vm367
      %vm372 = vmor %vm358, %vm368
      %vm373 = vmor %vm359, %vm369
      %374 = vset.pattern.permute.xlu0 2
      %375 = vperm.xlu0 %374, %v348
      %v376 = vpop.permute.xlu0 %375
      %377 = vset.pattern.permute.xlu0 2
      %378 = vperm.xlu0 %377, %v349
      %v379 = vpop.permute.xlu0 %378
      %vm380 = vcmp.eq.s32.totalorder %v376, %v346
      %vm381 = vcmp.eq.s32.totalorder %v376, %v347
      %vm382 = vcmp.eq.s32.totalorder %v379, %v346
      %vm383 = vcmp.eq.s32.totalorder %v379, %v347
      %vm384 = vmor %vm370, %vm380
      %vm385 = vmor %vm371, %vm381
      %vm386 = vmor %vm372, %vm382
      %vm387 = vmor %vm373, %vm383
      %388 = vset.pattern.permute.xlu0 3
      %389 = vperm.xlu0 %388, %v348
      %v390 = vpop.permute.xlu0 %389
      %391 = vset.pattern.permute.xlu0 3
      %392 = vperm.xlu0 %391, %v349
      %v393 = vpop.permute.xlu0 %392
      %vm394 = vcmp.eq.s32.totalorder %v390, %v346
      %vm395 = vcmp.eq.s32.totalorder %v390, %v347
      %vm396 = vcmp.eq.s32.totalorder %v393, %v346
      %vm397 = vcmp.eq.s32.totalorder %v393, %v347
      %vm398 = vmor %vm384, %vm394
      %vm399 = vmor %vm385, %vm395
      %vm400 = vmor %vm386, %vm396
      %vm401 = vmor %vm387, %vm397
      %402 = vset.pattern.permute.xlu0 4
      %403 = vperm.xlu0 %402, %v348
      %v404 = vpop.permute.xlu0 %403
      %405 = vset.pattern.permute.xlu0 4
      %406 = vperm.xlu0 %405, %v349
      %v407 = vpop.permute.xlu0 %406
      %vm408 = vcmp.eq.s32.totalorder %v404, %v346
      %vm409 = vcmp.eq.s32.totalorder %v404, %v347
      %vm410 = vcmp.eq.s32.totalorder %v407, %v346
      %vm411 = vcmp.eq.s32.totalorder %v407, %v347
      %vm412 = vmor %vm398, %vm408
      %vm413 = vmor %vm399, %vm409
      %vm414 = vmor %vm400, %vm410
      %vm415 = vmor %vm401, %vm411
      %416 = vset.pattern.permute.xlu0 5
      %417 = vperm.xlu0 %416, %v348
      %v418 = vpop.permute.xlu0 %417
      %419 = vset.pattern.permute.xlu0 5
      %420 = vperm.xlu0 %419, %v349
      %v421 = vpop.permute.xlu0 %420
      %vm422 = vcmp.eq.s32.totalorder %v418, %v346
      %vm423 = vcmp.eq.s32.totalorder %v418, %v347
      %vm424 = vcmp.eq.s32.totalorder %v421, %v346
      %vm425 = vcmp.eq.s32.totalorder %v421, %v347
      %vm426 = vmor %vm412, %vm422
      %vm427 = vmor %vm413, %vm423
      %vm428 = vmor %vm414, %vm424
      %vm429 = vmor %vm415, %vm425
      %430 = vset.pattern.permute.xlu0 6
      %431 = vperm.xlu0 %430, %v348
      %v432 = vpop.permute.xlu0 %431
      %433 = vset.pattern.permute.xlu0 6
      %434 = vperm.xlu0 %433, %v349
      %v435 = vpop.permute.xlu0 %434
      %vm436 = vcmp.eq.s32.totalorder %v432, %v346
      %vm437 = vcmp.eq.s32.totalorder %v432, %v347
      %vm438 = vcmp.eq.s32.totalorder %v435, %v346
      %vm439 = vcmp.eq.s32.totalorder %v435, %v347
      %vm440 = vmor %vm426, %vm436
      %vm441 = vmor %vm427, %vm437
      %vm442 = vmor %vm428, %vm438
      %vm443 = vmor %vm429, %vm439
      %v444 = vsel %vm440, 1, 0
      %v445 = vsel %vm441, 1, 0
      %v446 = vsel %vm442, 1, 0
      %v447 = vsel %vm443, 1, 0
      %v448 = vcvt.s32.f32 %v444
      %v449 = vcvt.s32.f32 %v445
      %v450 = vcvt.s32.f32 %v446
      %v451 = vcvt.s32.f32 %v447
      %v452 = vld [vmem:[%s2] sm:$0xff]
      %v453 = vld [vmem:[%s2 + $0x8] sm:$0xff]
      %v454 = vld [vmem:[%s2 + $0x10] sm:$0xff]
      %v455 = vld [vmem:[%s2 + $0x18] sm:$0xff]
      %v456 = vld [vmem:[%s2 + $0x20] sm:$0xff]
      %v457 = vld [vmem:[%s2 + $0x28] sm:$0xff]
      %v458 = vld [vmem:[%s2 + $0x30] sm:$0xff]
      %v459 = vld [vmem:[%s2 + $0x38] sm:$0xff]
      %v460 = vld [vmem:[%s2 + $0x40] sm:$0xff]
      %v461 = vld [vmem:[%s2 + $0x48] sm:$0xff]
      %v462 = vld [vmem:[%s2 + $0x50] sm:$0xff]
      %v463 = vld [vmem:[%s2 + $0x58] sm:$0xff]
      %v464 = vld [vmem:[%s2 + $0x60] sm:$0xff]
      %v465 = vld [vmem:[%s2 + $0x68] sm:$0xff]
      %v466 = vld [vmem:[%s2 + $0x70] sm:$0xff]
      %v467 = vld [vmem:[%s2 + $0x78] sm:$0xff]
      %v468 = vld [vmem:[%s2 + $0x80] sm:$0xff]
      %v469 = vld [vmem:[%s2 + $0x88] sm:$0xff]
      %v470 = vld [vmem:[%s2 + $0x90] sm:$0xff]
      %v471 = vld [vmem:[%s2 + $0x98] sm:$0xff]
      %v472 = vld [vmem:[%s2 + $0xa0] sm:$0xff]
      %v473 = vld [vmem:[%s2 + $0xa8] sm:$0xff]
      %v474 = vld [vmem:[%s2 + $0xb0] sm:$0xff]
      %v475 = vld [vmem:[%s2 + $0xb8] sm:$0xff]
      %v476 = vld [vmem:[%s2 + $0xc0] sm:$0xff]
      %v477 = vld [vmem:[%s2 + $0xc8] sm:$0xff]
      %v478 = vld [vmem:[%s2 + $0xd0] sm:$0xff]
      %v479 = vld [vmem:[%s2 + $0xd8] sm:$0xff]
      %v480 = vld [vmem:[%s2 + $0xe0] sm:$0xff]
      %v481 = vld [vmem:[%s2 + $0xe8] sm:$0xff]
      %v482 = vld [vmem:[%s2 + $0xf0] sm:$0xff]
      %v483 = vld [vmem:[%s2 + $0xf8] sm:$0xff]
      %v484 = vld [vmem:[%s331] sm:$0xff]
      %v485 = vld [vmem:[%s331 + $0x8] sm:$0xff]
      %v486 = vld [vmem:[%s3] sm:$0xff]
      %v487 = vld [vmem:[%s3 + $0x8] sm:$0xff]
      %vm488 = vcmask 130048
      %v490 = vsel %vm488, %v484, 0
      %v493 = vsel %vm488, %v485, 0
      %495 = vmatprep.subr.mxu0 0.0
      %496 = vmatpush1.msra.mxu0 %v486
      %497 = vmatprep.subr.mxu0 0.0
      %498 = vmatpush1.msra.mxu0 %v487
      %499 = vmatprep.subr.mxu0 0.0
      %500 = vmatpush1.msra.mxu0 0.0
      %501 = vmatprep.subr.mxu0 0.0
      %502 = vmatpush1.msra.mxu0 0.0
      %503 = vmatprep.subr.mxu0 0.0
      %504 = vmatpush1.msra.mxu0 0.0
      %505 = vmatprep.subr.mxu0 0.0
      %506 = vmatpush1.msra.mxu0 0.0
      %507 = vmatprep.subr.mxu0 0.0
      %508 = vmatpush1.msra.mxu0 0.0
      %509 = vmatprep.subr.mxu0 0.0
      %510 = vmatpush1.msra.mxu0 0.0
      %511 = vmatprep.subr.mxu0 0.0
      %512 = vmatpush1.msra.mxu0 0.0
      %513 = vmatprep.subr.mxu0 0.0
      %514 = vmatpush1.msra.mxu0 0.0
      %515 = vmatprep.subr.mxu0 0.0
      %516 = vmatpush1.msra.mxu0 0.0
      %517 = vmatprep.subr.mxu0 0.0
      %518 = vmatpush1.msra.mxu0 0.0
      %519 = vmatprep.subr.mxu0 0.0
      %520 = vmatpush1.msra.mxu0 0.0
      %521 = vmatprep.subr.mxu0 0.0
      %522 = vmatpush1.msra.mxu0 0.0
      %523 = vmatprep.subr.mxu0 0.0
      %524 = vmatpush1.msra.mxu0 0.0
      %525 = vmatprep.subr.mxu0 0.0
      %526 = vmatpush1.msra.mxu0 0.0
      %527 = vmatprep.subr.mxu0 0.0
      %528 = vmatpush1.msra.mxu0 0.0
      %529 = vmatprep.subr.mxu0 0.0
      %530 = vmatpush1.msra.mxu0 0.0
      %531 = vmatprep.subr.mxu0 0.0
      %532 = vmatpush1.msra.mxu0 0.0
      %533 = vmatprep.subr.mxu0 0.0
      %534 = vmatpush1.msra.mxu0 0.0
      %535 = vmatprep.subr.mxu0 0.0
      %536 = vmatpush1.msra.mxu0 0.0
      %537 = vmatprep.subr.mxu0 0.0
      %538 = vmatpush1.msra.mxu0 0.0
      %539 = vmatprep.subr.mxu0 0.0
      %540 = vmatpush1.msra.mxu0 0.0
      %541 = vmatprep.subr.mxu0 0.0
      %542 = vmatpush1.msra.mxu0 0.0
      %543 = vmatprep.subr.mxu0 0.0
      %544 = vmatpush1.msra.mxu0 0.0
      %545 = vmatprep.subr.mxu0 0.0
      %546 = vmatpush1.msra.mxu0 0.0
      %547 = vmatprep.subr.mxu0 0.0
      %548 = vmatpush1.msra.mxu0 0.0
      %549 = vmatprep.subr.mxu0 0.0
      %550 = vmatpush1.msra.mxu0 0.0
      %551 = vmatprep.subr.mxu0 0.0
      %552 = vmatpush1.msra.mxu0 0.0
      %553 = vmatprep.subr.mxu0 0.0
      %554 = vmatpush1.msra.mxu0 0.0
      %555 = vmatprep.subr.mxu0 0.0
      %556 = vmatpush1.msra.mxu0 0.0
      %557 = vmatprep.subr.mxu0 0.0
      %558 = vmatpush1.msra.mxu0 0.0
      %559 = vmatprep.mubr.f32.mxu0 0.0
      %560 = vmatmul.mubr.f32.gmra.mrb[0].mxu0 %v490
      %v561 = vpop.f32.mrb[0].mxu0
      %v562 = vadd.f32 0.0, %v561
      %v563 = vpop.f32.mrb[0].mxu0
      %564 = vmatprep.mubr.f32.mxu0 0.0
      %565 = vmatmul.mubr.f32.gmra.mrb[0].mxu0 %v493
      %v566 = vpop.f32.mrb[0].mxu0
      %v567 = vadd.f32 0.0, %v566
      %v568 = vpop.f32.mrb[0].mxu0
      %569 = vdwg.mxu0
      %570 = vmatprep.subr.mxu0 0.0
      %571 = vmatpush1.msra.mxu0 %v452
      %572 = vmatprep.subr.mxu0 0.0
      %573 = vmatpush1.msra.mxu0 %v453
      %574 = vmatprep.subr.mxu0 0.0
      %575 = vmatpush1.msra.mxu0 %v454
      %576 = vmatprep.subr.mxu0 0.0
      %577 = vmatpush1.msra.mxu0 %v455
      %578 = vmatprep.subr.mxu0 0.0
      %579 = vmatpush1.msra.mxu0 %v456
      %580 = vmatprep.subr.mxu0 0.0
      %581 = vmatpush1.msra.mxu0 %v457
      %582 = vmatprep.subr.mxu0 0.0
      %583 = vmatpush1.msra.mxu0 %v458
      %584 = vmatprep.subr.mxu0 0.0
      %585 = vmatpush1.msra.mxu0 %v459
      %586 = vmatprep.subr.mxu0 0.0
      %587 = vmatpush1.msra.mxu0 %v460
      %588 = vmatprep.subr.mxu0 0.0
      %589 = vmatpush1.msra.mxu0 %v461
      %590 = vmatprep.subr.mxu0 0.0
      %591 = vmatpush1.msra.mxu0 %v462
      %592 = vmatprep.subr.mxu0 0.0
      %593 = vmatpush1.msra.mxu0 %v463
      %594 = vmatprep.subr.mxu0 0.0
      %595 = vmatpush1.msra.mxu0 %v464
      %596 = vmatprep.subr.mxu0 0.0
      %597 = vmatpush1.msra.mxu0 %v465
      %598 = vmatprep.subr.mxu0 0.0
      %599 = vmatpush1.msra.mxu0 %v466
      %600 = vmatprep.subr.mxu0 0.0
      %601 = vmatpush1.msra.mxu0 %v467
      %602 = vmatprep.subr.mxu0 0.0
      %603 = vmatpush1.msra.mxu0 %v468
      %604 = vmatprep.subr.mxu0 0.0
      %605 = vmatpush1.msra.mxu0 %v469
      %606 = vmatprep.subr.mxu0 0.0
      %607 = vmatpush1.msra.mxu0 %v470
      %608 = vmatprep.subr.mxu0 0.0
      %609 = vmatpush1.msra.mxu0 %v471
      %610 = vmatprep.subr.mxu0 0.0
      %611 = vmatpush1.msra.mxu0 %v472
      %612 = vmatprep.subr.mxu0 0.0
      %613 = vmatpush1.msra.mxu0 %v473
      %614 = vmatprep.subr.mxu0 0.0
      %615 = vmatpush1.msra.mxu0 %v474
      %616 = vmatprep.subr.mxu0 0.0
      %617 = vmatpush1.msra.mxu0 %v475
      %618 = vmatprep.subr.mxu0 0.0
      %619 = vmatpush1.msra.mxu0 %v476
      %620 = vmatprep.subr.mxu0 0.0
      %621 = vmatpush1.msra.mxu0 %v477
      %622 = vmatprep.subr.mxu0 0.0
      %623 = vmatpush1.msra.mxu0 %v478
      %624 = vmatprep.subr.mxu0 0.0
      %625 = vmatpush1.msra.mxu0 %v479
      %626 = vmatprep.subr.mxu0 0.0
      %627 = vmatpush1.msra.mxu0 %v480
      %628 = vmatprep.subr.mxu0 0.0
      %629 = vmatpush1.msra.mxu0 %v481
      %630 = vmatprep.subr.mxu0 0.0
      %631 = vmatpush1.msra.mxu0 %v482
      %632 = vmatprep.subr.mxu0 0.0
      %633 = vmatpush1.msra.mxu0 %v483
      %634 = vmatprep.mubr.f32.mxu0 %v449
      %635 = vmatmul.mubr.f32.gmra.mrb[0].mxu0 %v448
      %v636 = vpop.f32.mrb[0].mxu0
      %v637 = vadd.f32 %v562, %v636
      %v638 = vpop.f32.mrb[0].mxu0
      %639 = vmatprep.mubr.f32.mxu0 %v451
      %640 = vmatmul.mubr.f32.gmra.mrb[0].mxu0 %v450
      %v641 = vpop.f32.mrb[0].mxu0
      %v642 = vadd.f32 %v567, %v641
      %v643 = vpop.f32.mrb[0].mxu0
      %644 = vdwg.mxu0
      %v645 = vld [vmem:[%s4] sm:$0x1]
      %v647 = vlaneseq
      %v648 = vshrl.u32 %v647, 7
      %v649 = vsub.s32 0, %v648
      %v650 = vrot.slane %v645, %v649
      %v652 = vadd.f32 %v637, %v650
      %v653 = vadd.f32 %v642, %v650
      %v654 = vmax.f32 %v652, 0.0
      %v655 = vmax.f32 %v653, 0.0
      %v656 = vld [vmem:[%s5] sm:$0xff]
      %v657 = vld [vmem:[%s5 + $0x8] sm:$0xff]
      %v658 = vld [vmem:[%s5 + $0x10] sm:$0xff]
      %v659 = vld [vmem:[%s5 + $0x18] sm:$0xff]
      %v660 = vld [vmem:[%s5 + $0x20] sm:$0xff]
      %v661 = vld [vmem:[%s5 + $0x28] sm:$0xff]
      %v662 = vld [vmem:[%s5 + $0x30] sm:$0xff]
      %v663 = vld [vmem:[%s5 + $0x38] sm:$0xff]
      %v664 = vld [vmem:[%s5 + $0x40] sm:$0xff]
      %v665 = vld [vmem:[%s5 + $0x48] sm:$0xff]
      %v666 = vld [vmem:[%s5 + $0x50] sm:$0xff]
      %v667 = vld [vmem:[%s5 + $0x58] sm:$0xff]
      %v668 = vld [vmem:[%s5 + $0x60] sm:$0xff]
      %v669 = vld [vmem:[%s5 + $0x68] sm:$0xff]
      %v670 = vld [vmem:[%s5 + $0x70] sm:$0xff]
      %v671 = vld [vmem:[%s5 + $0x78] sm:$0xff]
      %v672 = vld [vmem:[%s6] sm:$0x1]
      %v674 = vlaneseq
      %v675 = vshrl.u32 %v674, 7
      %v676 = vsub.s32 0, %v675
      %v677 = vrot.slane %v672, %v676
      %679 = vmatprep.subr.mxu0 0.0
      %680 = vmatpush1.msra.mxu0 %v656
      %681 = vmatprep.subr.mxu0 0.0
      %682 = vmatpush1.msra.mxu0 %v657
      %683 = vmatprep.subr.mxu0 0.0
      %684 = vmatpush1.msra.mxu0 %v658
      %685 = vmatprep.subr.mxu0 0.0
      %686 = vmatpush1.msra.mxu0 %v659
      %687 = vmatprep.subr.mxu0 0.0
      %688 = vmatpush1.msra.mxu0 %v660
      %689 = vmatprep.subr.mxu0 0.0
      %690 = vmatpush1.msra.mxu0 %v661
      %691 = vmatprep.subr.mxu0 0.0
      %692 = vmatpush1.msra.mxu0 %v662
      %693 = vmatprep.subr.mxu0 0.0
      %694 = vmatpush1.msra.mxu0 %v663
      %695 = vmatprep.subr.mxu0 0.0
      %696 = vmatpush1.msra.mxu0 %v664
      %697 = vmatprep.subr.mxu0 0.0
      %698 = vmatpush1.msra.mxu0 %v665
      %699 = vmatprep.subr.mxu0 0.0
      %700 = vmatpush1.msra.mxu0 %v666
      %701 = vmatprep.subr.mxu0 0.0
      %702 = vmatpush1.msra.mxu0 %v667
      %703 = vmatprep.subr.mxu0 0.0
      %704 = vmatpush1.msra.mxu0 %v668
      %705 = vmatprep.subr.mxu0 0.0
      %706 = vmatpush1.msra.mxu0 %v669
      %707 = vmatprep.subr.mxu0 0.0
      %708 = vmatpush1.msra.mxu0 %v670
      %709 = vmatprep.subr.mxu0 0.0
      %710 = vmatpush1.msra.mxu0 %v671
      %711 = vmatprep.subr.mxu0 0.0
      %712 = vmatpush1.msra.mxu0 0.0
      %713 = vmatprep.subr.mxu0 0.0
      %714 = vmatpush1.msra.mxu0 0.0
      %715 = vmatprep.subr.mxu0 0.0
      %716 = vmatpush1.msra.mxu0 0.0
      %717 = vmatprep.subr.mxu0 0.0
      %718 = vmatpush1.msra.mxu0 0.0
      %719 = vmatprep.subr.mxu0 0.0
      %720 = vmatpush1.msra.mxu0 0.0
      %721 = vmatprep.subr.mxu0 0.0
      %722 = vmatpush1.msra.mxu0 0.0
      %723 = vmatprep.subr.mxu0 0.0
      %724 = vmatpush1.msra.mxu0 0.0
      %725 = vmatprep.subr.mxu0 0.0
      %726 = vmatpush1.msra.mxu0 0.0
      %727 = vmatprep.subr.mxu0 0.0
      %728 = vmatpush1.msra.mxu0 0.0
      %729 = vmatprep.subr.mxu0 0.0
      %730 = vmatpush1.msra.mxu0 0.0
      %731 = vmatprep.subr.mxu0 0.0
      %732 = vmatpush1.msra.mxu0 0.0
      %733 = vmatprep.subr.mxu0 0.0
      %734 = vmatpush1.msra.mxu0 0.0
      %735 = vmatprep.subr.mxu0 0.0
      %736 = vmatpush1.msra.mxu0 0.0
      %737 = vmatprep.subr.mxu0 0.0
      %738 = vmatpush1.msra.mxu0 0.0
      %739 = vmatprep.subr.mxu0 0.0
      %740 = vmatpush1.msra.mxu0 0.0
      %741 = vmatprep.subr.mxu0 0.0
      %742 = vmatpush1.msra.mxu0 0.0
      %743 = vmatprep.mubr.f32.mxu0 0.0
      %744 = vmatmul.mubr.f32.gmra.mrb[0].mxu0 %v654
      %v745 = vpop.f32.mrb[0].mxu0
      %v746 = vadd.f32 %v677, %v745
      %v747 = vpop.f32.mrb[0].mxu0
      %748 = vmatprep.mubr.f32.mxu0 0.0
      %749 = vmatmul.mubr.f32.gmra.mrb[0].mxu0 %v655
      %v750 = vpop.f32.mrb[0].mxu0
      %v751 = vadd.f32 %v677, %v750
      %v752 = vpop.f32.mrb[0].mxu0
      %753 = vdwg.mxu0
      %vm754 = vcmask 261120
      %755 = vst.msk [vmem:[%s337] sm:$0xff] %vm754, %v746
      %756 = vst.msk [vmem:[%s337 + $0x8] sm:$0xff] %vm754, %v751
      %759 = vrot.lane.b32.xlu0 %v746, 96
      %v760 = vpop.permute.xlu0 %759
      %761 = vrot.lane.b32.xlu0 %v751, 96
      %v762 = vpop.permute.xlu0 %761
      %765 = vst.msk [vmem:[%s343] sm:$0xff] %vm754, %v760
      %766 = vst.msk [vmem:[%s343 + $0x8] sm:$0xff] %vm754, %v762
      %s767 = smul.u32 2, %s20
      %p768 = scmp.lt.s32.totalorder %s767, 3
      %s769 = scalar_select %p768, %s767, 3
      %s770 = smul.addr %s769, 8
      %s771 = scalar_lea.vmem %s7, %s770
      %s772 = smul.u32 2, %s20
      %p773 = scmp.lt.s32.totalorder %s772, 3
      %s774 = scalar_select %p773, %s772, 3
      %s775 = smul.addr %s774, 8
      %s776 = scalar_lea.vmem %s8, %s775
      // Predicated region
      $region49: #{user_category_forward.1} parent=47 // pred_check
        %p777 = pneg %p195
      $region50: #{user_category_forward.1} parent=47 // pred_check_branch
        %779 = sbr.rel (%p777) target = $region52
      $region51: #{user_category_forward.1} parent=47 // pred_region
        %s780 = smul.u32 2, %s20
      $region52: #{user_category_forward.1} parent=47 // pred_fallthru
        _
      // Predicated region
      $region53: #{user_category_forward.1} parent=47 // pred_check
        %p781 = pneg %p221
      $region54: #{user_category_forward.1} parent=47 // pred_check_branch
        %783 = sbr.rel (%p781) target = $region56
      $region55: #{user_category_forward.1} parent=47 // pred_region
        %s784 = smul.u32 2, %s20
      $region56: #{user_category_forward.1} parent=47 // pred_fallthru
        _
    $region48: #{user_category_forward.1} parent=5 // pred_fallthru
      _
    %p785 = scmp.le.s32.totalorder 2, %s15
    // Predicated region
    $region57: #{user_category_forward.1} parent=5 // pred_check
      %p786 = pneg %p785
    $region58: #{user_category_forward.1} parent=5 // pred_check_branch
      %788 = sbr.rel (%p786) target = $region60
    $region59: #{user_category_forward.1} parent=5 // pred_region
      %s789 = ssub.s32 %s15, 2
      // Predicated region
      $region61: #{user_category_forward.1} parent=59 // pred_check
        %p790 = pneg %p201
      $region62: #{user_category_forward.1} parent=59 // pred_check_branch
        %792 = sbr.rel (%p790) target = $region64
      $region63: #{user_category_forward.1} parent=59 // pred_region
        %s793 = smul.u32 2, %s21
        %p794 = scmp.lt.s32.totalorder %s793, 3
        %s795 = scalar_select %p794, %s793, 3
        %s796 = smul.addr %s795, 8
        %s797 = scalar_lea.vmem %s7, %s796
      $region64: #{user_category_forward.1} parent=59 // pred_fallthru
        _
      // Predicated region
      $region65: #{user_category_forward.1} parent=59 // pred_check
        %p798 = pneg %p227
      $region66: #{user_category_forward.1} parent=59 // pred_check_branch
        %800 = sbr.rel (%p798) target = $region68
      $region67: #{user_category_forward.1} parent=59 // pred_region
        %s801 = smul.u32 2, %s21
        %p802 = scmp.lt.s32.totalorder %s801, 3
        %s803 = scalar_select %p802, %s801, 3
        %s804 = smul.addr %s803, 8
        %s805 = scalar_lea.vmem %s8, %s804
      $region68: #{user_category_forward.1} parent=59 // pred_fallthru
        _
    $region60: #{user_category_forward.1} parent=5 // pred_fallthru
      _
  $region6: #{user_category_forward.1} parent=0 // loop_footer
    %s19 = sadd.s32 1, %s15
  $region7: #{user_category_forward.1} parent=0 // loop_footer_branch
    %14 = sbr.rel target = $region3
  $region8: #{user_category_forward.1} parent=0 // loop_exit
    _

</llo_original>
